<compile_context>
chip_gen: v7x
topology: tpu7x:2x2x1
jax: 0.10.0
libtpu: 0.0.40
codegen_flags: <defaults>
</compile_context>

<pallas_src>
import math

import jax
import jax.numpy as jnp
from jax.experimental import pallas as pl
from jax.experimental.pallas import tpu as pltpu


# ----------------------------- shared helpers -----------------------------

def _ln(x, g, b, eps=1e-5):
    """LayerNorm over the last dim; statistics kept in f32."""
    x = x.astype(jnp.float32)
    mu = jnp.mean(x, axis=-1, keepdims=True)
    var = jnp.mean(jnp.square(x - mu), axis=-1, keepdims=True)
    return (x - mu) * jax.lax.rsqrt(var + eps) * g + b


def _mm(a, w_ref):
    """bf16 MXU matmul with f32 accumulation."""
    return jnp.dot(a.astype(jnp.bfloat16), w_ref[...],
                   preferred_element_type=jnp.float32)


def _rep_spec(shape):
    """Full-array block, same block every grid step (weights)."""
    nd = len(shape)
    return pl.BlockSpec(shape, lambda b, _nd=nd: (0,) * _nd)


# ------------------ kernel 1: transform + LayerNorm + head tiling (fused) ------------------

def transform_ln_kernel(x_ref, w_ref, b_ref, g_ref, beta_ref, o_ref):
    y = _mm(x_ref[...], w_ref) + b_ref[...]
    o_ref[...] = _ln(y, g_ref[...], beta_ref[...]).astype(o_ref.dtype)


def transform_ln_tiled(x, w_t, b_t, g_t, beta_t, n_heads):
    """Fused Linear(input_dim->feat_dim) + LayerNorm(feat_dim) + repeat features n_heads times.

    Implemented by tiling the weights: LayerNorm of a replicated vector equals the replicated
    LayerNorm, so the tiled-weight formulation is exact and the output is lane dense (d_model).
    """
    B, T, Din = x.shape
    feat = w_t.shape[1]
    D = feat * n_heads
    w = jnp.tile(w_t, (1, n_heads)).astype(jnp.bfloat16)       # (Din, D)
    b = jnp.tile(b_t, (1, n_heads)).astype(jnp.float32)
    g = jnp.tile(g_t, (1, n_heads)).astype(jnp.float32)
    beta = jnp.tile(beta_t, (1, n_heads)).astype(jnp.float32)
    out = pl.pallas_call(
        transform_ln_kernel,
        out_shape=jax.ShapeDtypeStruct((B * T, D), jnp.bfloat16),
        compiler_params=pltpu.CompilerParams(vmem_limit_bytes=32 * 1024 * 1024),
    )(x.reshape(B * T, Din), w, b, g, beta)
    return out.reshape(B, T, D)


# ------------------------ kernel 2: one Conformer encoder block ------------------------

# Row layout of the packed (N_VEC_D, d_model) vector slab (all f32).
LN1_G, LN1_B = 0, 1
FF1_B2 = 2
LNM_G, LNM_B = 3, 4
B_O = 5
LNC_G, LNC_B = 6, 7
DW_B = 8
PW2_B = 9
LN2_G, LN2_B = 10, 11
FF2_B2 = 12
LNF_G, LNF_B = 13, 14
N_VEC_D = 16  # padded to a multiple of 8 sublanes


def make_block_kernel(n_heads, d_k, d_v, d_model, T):
    scale = 1.0 / math.sqrt(d_k)

    def kernel(x_ref, bias_ref,
               vec_d_ref, vec_ff_ref, b_qkv_ref, b_pw1_ref,
               w_ff1_in_ref, w_ff1_out_ref,
               w_qkv_ref, w_o_ref,
               w_pw1_ref, w_dw_ref, w_pw2_ref,
               w_ff2_in_ref, w_ff2_out_ref,
               o_ref, ctx_ref):
        h = x_ref[0].astype(jnp.float32)           # (T, D) residual stream, f32
        bias = bias_ref[0]                         # (T, T) additive mask bias (precomputed)
        vd = vec_d_ref[...]                        # (16, D)
        vff = vec_ff_ref[...]                      # (2, d_ff)

        def vrow(i):
            return vd[i:i + 1, :]                  # (1, D)

        # ---- feed-forward module 1 (half-step residual) ----
        z = _ln(h, vrow(LN1_G), vrow(LN1_B))
        z = jax.nn.silu(_mm(z, w_ff1_in_ref) + vff[0:1, :])
        z = _mm(z, w_ff1_out_ref) + vrow(FF1_B2)
        h = h + 0.5 * z

        # ---- multi-head self-attention (fused QKV, per-head dot_general, scratch slab) ----
        z = _ln(h, vrow(LNM_G), vrow(LNM_B))
        qkv = _mm(z, w_qkv_ref) + b_qkv_ref[...]   # (T, 3*D)
        q = qkv[:, 0:d_model]
        k = qkv[:, d_model:2 * d_model]
        v = qkv[:, 2 * d_model:3 * d_model]
        for hh in range(n_heads):                  # static unroll; heads are tiny
            qh = q[:, hh * d_k:(hh + 1) * d_k].astype(jnp.bfloat16)
            kh = k[:, hh * d_k:(hh + 1) * d_k].astype(jnp.bfloat16)
            vh = v[:, hh * d_v:(hh + 1) * d_v].astype(jnp.bfloat16)
            # q @ k^T without materializing a transpose.
            s = jax.lax.dot_general(qh, kh, (((1,), (1,)), ((), ())),
                                    preferred_element_type=jnp.float32)
            s = s * scale + bias                   # mask hoisted out of kernel / head loop
            m = jnp.max(s, axis=-1, keepdims=True)
            e = jnp.exp(s - m)
            a = e * pl.reciprocal(jnp.sum(e, axis=-1, keepdims=True), approx=True)
            ctx = jnp.dot(a.astype(jnp.bfloat16), vh,
                          preferred_element_type=jnp.float32)
            ctx_ref[:, hh * d_v:(hh + 1) * d_v] = ctx.astype(ctx_ref.dtype)
        z = _mm(ctx_ref[...], w_o_ref) + vrow(B_O)
        h = h + z

        # ---- convolution module: pointwise -> GLU -> depthwise(k=3) -> swish -> pointwise ----
        z = _ln(h, vrow(LNC_G), vrow(LNC_B))
        z = _mm(z, w_pw1_ref) + b_pw1_ref[...]     # (T, 2*D)
        zg = z[:, 0:d_model] * jax.nn.sigmoid(z[:, d_model:2 * d_model])   # GLU
        wdw = w_dw_ref[...].astype(jnp.float32)    # (3, D)
        row = jax.lax.broadcasted_iota(jnp.int32, (T, d_model), 0)
        z_prev = jnp.where(row == 0, 0.0, pltpu.roll(zg, shift=1, axis=0))
        z_next = jnp.where(row == T - 1, 0.0, pltpu.roll(zg, shift=T - 1, axis=0))
        z = z_prev * wdw[0:1, :] + zg * wdw[1:2, :] + z_next * wdw[2:3, :] + vrow(DW_B)
        # TODO(synk): reference conformer conv module has a BatchNorm here; treated as identity (inference).
        z = jax.nn.silu(z)
        z = _mm(z, w_pw2_ref) + vrow(PW2_B)
        h = h + z

        # ---- feed-forward module 2 (half-step residual) + final LN ----
        z = _ln(h, vrow(LN2_G), vrow(LN2_B))
        z = jax.nn.silu(_mm(z, w_ff2_in_ref) + vff[1:2, :])
        z = _mm(z, w_ff2_out_ref) + vrow(FF2_B2)
        h = h + 0.5 * z
        o_ref[0] = _ln(h, vrow(LNF_G), vrow(LNF_B)).astype(o_ref.dtype)

    return kernel


def conformer_block(x, bias, p, n_heads, d_k, d_v):
    B, T, D = x.shape
    kernel = make_block_kernel(n_heads, d_k, d_v, D, T)
    weights = [p["vec_d"], p["vec_ff"], p["b_qkv"], p["b_pw1"],
               p["w_ff1_in"], p["w_ff1_out"], p["w_qkv"], p["w_o"],
               p["w_pw1"], p["w_dw"], p["w_pw2"],
               p["w_ff2_in"], p["w_ff2_out"]]
    in_specs = ([pl.BlockSpec((1, T, D), lambda b: (b, 0, 0)),
                 pl.BlockSpec((1, T, T), lambda b: (b, 0, 0))] +
                [_rep_spec(w.shape) for w in weights])
    return pl.pallas_call(
        kernel,
        out_shape=jax.ShapeDtypeStruct((B, T, D), jnp.bfloat16),
        grid=(B,),
        in_specs=in_specs,
        out_specs=pl.BlockSpec((1, T, D), lambda b: (b, 0, 0)),
        scratch_shapes=[pltpu.VMEM((T, n_heads * d_v), jnp.bfloat16)],
        compiler_params=pltpu.CompilerParams(
            dimension_semantics=("parallel",),          # B split across TCs on v7x
            vmem_limit_bytes=32 * 1024 * 1024),
    )(x, bias, *weights)


# ------------------------ kernel 3: stats pooling + classifier head ------------------------

def stats_head_kernel(h_ref, w1_ref, b1_ref, w2_ref, b2_ref, w3_ref, b3_ref, o_ref):
    h = h_ref[...].astype(jnp.float32)             # (B, T, D)
    T = h.shape[1]
    mean = jnp.mean(h, axis=1)                     # (B, D)
    var = jnp.sum(jnp.square(h - mean[:, None, :]), axis=1) / (T - 1)   # unbiased (torch.std)
    stats = jnp.concatenate([mean, jnp.sqrt(var)], axis=-1)             # (B, 2*D)
    z = jnp.maximum(_mm(stats, w1_ref) + b1_ref[...], 0.0)
    z = jnp.maximum(_mm(z, w2_ref) + b2_ref[...], 0.0)
    o_ref[...] = _mm(z, w3_ref) + b3_ref[...]


def stats_head(h, params):
    B, T, D = h.shape
    w1, b1, w2, b2, w3, b3 = params
    n_lang = w3.shape[1]
    return pl.pallas_call(
        stats_head_kernel,
        out_shape=jax.ShapeDtypeStruct((B, n_lang), jnp.float32),
        compiler_params=pltpu.CompilerParams(vmem_limit_bytes=32 * 1024 * 1024),
    )(h, w1, b1, w2, b2, w3, b3)


# ------------------------ parameter initialization ------------------------

def _dense(key, fan_in, fan_out, dtype=jnp.bfloat16):
    return (jax.random.normal(key, (fan_in, fan_out), jnp.float32)
            * (1.0 / math.sqrt(fan_in))).astype(dtype)


def init_block_params(key, d_model, d_ff, n_heads, d_k, d_v):
    assert n_heads * d_k == d_model and n_heads * d_v == d_model
    ks = jax.random.split(key, 11)
    vec_d = jnp.zeros((N_VEC_D, d_model), jnp.float32)
    vec_d = vec_d.at[jnp.array([LN1_G, LNM_G, LNC_G, LN2_G, LNF_G])].set(1.0)  # LN gains = 1
    return {
        "vec_d": vec_d,                                         # packed (1,D) vectors, f32
        "vec_ff": jnp.zeros((2, d_ff), jnp.float32),            # ff1/ff2 inner biases
        "b_qkv": jnp.zeros((1, 3 * d_model), jnp.float32),
        "b_pw1": jnp.zeros((1, 2 * d_model), jnp.float32),
        "w_ff1_in": _dense(ks[0], d_model, d_ff),
        "w_ff1_out": _dense(ks[1], d_ff, d_model),
        "w_qkv": jnp.concatenate([_dense(ks[2], d_model, n_heads * d_k),
                                  _dense(ks[3], d_model, n_heads * d_k),
                                  _dense(ks[4], d_model, n_heads * d_v)], axis=1),
        "w_o": _dense(ks[5], n_heads * d_v, d_model),
        "w_pw1": _dense(ks[6], d_model, 2 * d_model),
        "w_dw": (jax.random.normal(ks[7], (3, d_model), jnp.float32) * 0.1).astype(jnp.bfloat16),
        "w_pw2": _dense(ks[8], d_model, d_model),
        "w_ff2_in": _dense(ks[9], d_model, d_ff),
        "w_ff2_out": _dense(ks[10], d_ff, d_model),
    }


# ------------------------ full forward (glue is plain JAX) ------------------------

def conformer_forward(x, atten_mask, params, n_heads, d_k, d_v):
    # masked_fill semantics -> additive bias, computed ONCE (hoisted out of all blocks & heads).
    bias = jnp.where(atten_mask > 0, -1e9, 0.0).astype(jnp.float32)
    # transform + layernorm1 + "unsqueeze/repeat/transpose/view" head tiling, fused.
    out = transform_ln_tiled(x, params["w_t"], params["b_t"],
                             params["ln1_g"], params["ln1_b"], n_heads)
    # 4 conformer encoder blocks
    for blk in params["blocks"]:
        out = conformer_block(out, bias, blk, n_heads, d_k, d_v)
    # stats pooling (mean || std) + fc1/relu + fc2/relu + fc3
    return stats_head(out, params["head"])


# ------------------------ example run ------------------------

if __name__ == "__main__":
    B, T = 2, 16
    input_dim, feat_dim, n_heads = 16, 32, 4
    d_k, d_v, d_ff = 32, 32, 256
    n_lang = 5
    d_model = feat_dim * n_heads          # 128 -> lane-dense last dim everywhere

    root = jax.random.PRNGKey(0)
    k_x, k_t, k_b1, k_b2, k_b3, k_b4, k_h1, k_h2, k_h3 = jax.random.split(root, 9)

    x = jax.random.normal(k_x, (B, T, input_dim), jnp.float32)
    # mask: batch 1 has its last 4 frames padded (1.0 = masked)
    atten_mask = jnp.zeros((B, T, T), jnp.float32).at[1, :, T - 4:].set(1.0)

    params = {
        "w_t": (jax.random.normal(k_t, (input_dim, feat_dim), jnp.float32)
                / math.sqrt(input_dim)),
        "b_t": jnp.zeros((1, feat_dim), jnp.float32),
        "ln1_g": jnp.ones((1, feat_dim), jnp.float32),
        "ln1_b": jnp.zeros((1, feat_dim), jnp.float32),
        "blocks": [init_block_params(k, d_model, d_ff, n_heads, d_k, d_v)
                   for k in (k_b1, k_b2, k_b3, k_b4)],
        "head": [
            _dense(k_h1, 2 * d_model, d_model), jnp.zeros((1, d_model), jnp.float32),
            _dense(k_h2, d_model, d_model), jnp.zeros((1, d_model), jnp.float32),
            _dense(k_h3, d_model, n_lang), jnp.zeros((1, n_lang), jnp.float32),
        ],
    }

    logits = conformer_forward(x, atten_mask, params, n_heads, d_k, d_v)
    logits = jax.block_until_ready(logits)
    assert logits.shape == (B, n_lang)
    assert bool(jnp.all(jnp.isfinite(logits)))
    print("KERNEL_OK")
</pallas_src>

<mosaic_0001>
module attributes {stable_mosaic.version = 11 : i64} {
  func.func @transform_ln_kernel(%arg0: memref<32x16xf32, #tpu.memory_space<vmem>>, %arg1: memref<16x128xbf16, #tpu.memory_space<vmem>>, %arg2: memref<1x128xf32, #tpu.memory_space<vmem>>, %arg3: memref<1x128xf32, #tpu.memory_space<vmem>>, %arg4: memref<1x128xf32, #tpu.memory_space<vmem>>, %arg5: memref<32x128xbf16, #tpu.memory_space<vmem>>) attributes {dimension_semantics = [], scalar_prefetch = 0 : i64, scratch_operands = 0 : i64, tpu.core_type = #tpu.core_type<tc>} {
    %c0 = arith.constant 0 : index
    %c0_0 = arith.constant 0 : index
    %0 = vector.load %arg0[%c0, %c0_0] : memref<32x16xf32, #tpu.memory_space<vmem>>, vector<32x16xf32>
    %1 = arith.truncf %0 : vector<32x16xf32> to vector<32x16xbf16>
    %c0_1 = arith.constant 0 : index
    %c0_2 = arith.constant 0 : index
    %2 = vector.load %arg1[%c0_1, %c0_2] : memref<16x128xbf16, #tpu.memory_space<vmem>>, vector<16x128xbf16>
    %cst = arith.constant dense<0.000000e+00> : vector<32x128xf32>
    %3 = tpu.matmul %1, %2, %cst {dimension_numbers = #tpu.dot_dimension_numbers<[1], [0], [0], [1], [0, 0, 1, 1], [], []>} : vector<32x16xbf16>, vector<16x128xbf16>, vector<32x128xf32> -> vector<32x128xf32>
    %c0_3 = arith.constant 0 : index
    %c0_4 = arith.constant 0 : index
    %4 = vector.load %arg2[%c0_3, %c0_4] : memref<1x128xf32, #tpu.memory_space<vmem>>, vector<1x128xf32>
    %5 = vector.broadcast %4 : vector<1x128xf32> to vector<32x128xf32>
    %6 = arith.addf %3, %5 : vector<32x128xf32>
    %c0_5 = arith.constant 0 : index
    %c0_6 = arith.constant 0 : index
    %7 = vector.load %arg3[%c0_5, %c0_6] : memref<1x128xf32, #tpu.memory_space<vmem>>, vector<1x128xf32>
    %c0_7 = arith.constant 0 : index
    %c0_8 = arith.constant 0 : index
    %8 = vector.load %arg4[%c0_7, %c0_8] : memref<1x128xf32, #tpu.memory_space<vmem>>, vector<1x128xf32>
    %cst_9 = arith.constant dense<0.000000e+00> : vector<32xf32>
    %9 = vector.multi_reduction <add>, %6, %cst_9 [1] : vector<32x128xf32> to vector<32xf32>
    %10 = vector.shape_cast %9 : vector<32xf32> to vector<32x1xf32>
    %cst_10 = arith.constant 1.280000e+02 : f32
    %11 = vector.broadcast %cst_10 : f32 to vector<32x1xf32>
    %12 = arith.divf %10, %11 : vector<32x1xf32>
    %13 = vector.broadcast %12 : vector<32x1xf32> to vector<32x128xf32>
    %14 = arith.subf %6, %13 : vector<32x128xf32>
    %15 = arith.mulf %14, %14 : vector<32x128xf32>
    %cst_11 = arith.constant dense<0.000000e+00> : vector<32xf32>
    %16 = vector.multi_reduction <add>, %15, %cst_11 [1] : vector<32x128xf32> to vector<32xf32>
    %17 = vector.shape_cast %16 : vector<32xf32> to vector<32x1xf32>
    %cst_12 = arith.constant 1.280000e+02 : f32
    %18 = vector.broadcast %cst_12 : f32 to vector<32x1xf32>
    %19 = arith.divf %17, %18 : vector<32x1xf32>
    %20 = vector.broadcast %12 : vector<32x1xf32> to vector<32x128xf32>
    %21 = arith.subf %6, %20 : vector<32x128xf32>
    %cst_13 = arith.constant 9.99999974E-6 : f32
    %22 = vector.broadcast %cst_13 : f32 to vector<32x1xf32>
    %23 = arith.addf %19, %22 : vector<32x1xf32>
    %24 = math.rsqrt %23 : vector<32x1xf32>
    %25 = vector.broadcast %24 : vector<32x1xf32> to vector<32x128xf32>
    %26 = arith.mulf %21, %25 : vector<32x128xf32>
    %27 = vector.broadcast %7 : vector<1x128xf32> to vector<32x128xf32>
    %28 = arith.mulf %26, %27 : vector<32x128xf32>
    %29 = vector.broadcast %8 : vector<1x128xf32> to vector<32x128xf32>
    %30 = arith.addf %28, %29 : vector<32x128xf32>
    %31 = arith.truncf %30 : vector<32x128xf32> to vector<32x128xbf16>
    %c0_14 = arith.constant 0 : index
    %c0_15 = arith.constant 0 : index
    %32 = vector.load %arg5[%c0_14, %c0_15] : memref<32x128xbf16, #tpu.memory_space<vmem>>, vector<32x128xbf16>
    tpu.vector_store %arg5[%c0_14, %c0_15], %31 {strides = array<i32>} : memref<32x128xbf16, #tpu.memory_space<vmem>>, vector<32x128xbf16>,
    return
  }
}

</mosaic_0001>

<llo_original>
// kernel: tpu_custom_call.1
$region0: #{tpu_custom_call.1}
  #allocation0 [shape = 'u32[]', space=smem, size = 0x4, offset = 0x4, fixed_abs, tag = 'smem constant byte address 0x4 - core index']
  #allocation1 [shape = 'u32[144,128]{1,0:T(1,128)}', space=vmem, size = 0x12000, scoped, tag = 'internal scratch']
  %s0 = inlined_call_operand.vmem [shape: f32[32,16], index: 0, kind: input, shape index: {}]
  %s1 = inlined_call_operand.vmem [shape: bf16[16,128], index: 1, kind: input, shape index: {}]
  %s2 = inlined_call_operand.vmem [shape: f32[1,128], index: 2, kind: input, shape index: {}]
  %s3 = inlined_call_operand.vmem [shape: f32[1,128], index: 3, kind: input, shape index: {}]
  %s4 = inlined_call_operand.vmem [shape: f32[1,128], index: 4, kind: input, shape index: {}]
  %s5 = inlined_call_operand.hbm [shape: bf16[32,128], index: 5, kind: output, shape index: {}]
  %s6 = sld [smem:[#allocation0]]
  $region30: #{tpu_custom_call.1} parent=0
    _
  %s8 = ssub.s32 1, %s6
  %s9 = scalar_select 0, %s8, %s6
  $region1: #{tpu_custom_call.1} parent=0
    #allocation2 [shape = 'u8[8192]{0}', space=vmem, size = 0x2000, scoped, tag = 'output window, operand 0, single buffered']
    #allocation3 [shape = 's32[1]{0}', space=sflag, size = 0x4, scoped, tag = 'scoped memory for tpu_custom_call.1']
    %10 = vsyncpa [#allocation3], 0
    // Predicated region
    $region2: #{tpu_custom_call.1} parent=1 // pred_check
      _
    $region3: #{tpu_custom_call.1} parent=1 // pred_check_branch
      %12 = sbr.rel (0) target = $region5
    $region4: #{tpu_custom_call.1} parent=1 // pred_region
      _
    $region5: #{tpu_custom_call.1} parent=1 // pred_fallthru
      _
    // Predicated region
    $region6: #{tpu_custom_call.1} parent=1 // pred_check
      _
    $region7: #{tpu_custom_call.1} parent=1 // pred_check_branch
      %14 = sbr.rel (0) target = $region9
    $region8: #{tpu_custom_call.1} parent=1 // pred_region
      _
    $region9: #{tpu_custom_call.1} parent=1 // pred_fallthru
      _
    // Predicated region
    $region10: #{tpu_custom_call.1} parent=1 // pred_check
      _
    $region11: #{tpu_custom_call.1} parent=1 // pred_check_branch
      %16 = sbr.rel (0) target = $region13
    $region12: #{tpu_custom_call.1} parent=1 // pred_region
      _
    $region13: #{tpu_custom_call.1} parent=1 // pred_fallthru
      _
    // Predicated region
    $region14: #{tpu_custom_call.1} parent=1 // pred_check
      _
    $region15: #{tpu_custom_call.1} parent=1 // pred_check_branch
      %18 = sbr.rel (0) target = $region17
    $region16: #{tpu_custom_call.1} parent=1 // pred_region
      _
    $region17: #{tpu_custom_call.1} parent=1 // pred_fallthru
      _
    // Predicated region
    $region18: #{tpu_custom_call.1} parent=1 // pred_check
      _
    $region19: #{tpu_custom_call.1} parent=1 // pred_check_branch
      %20 = sbr.rel (0) target = $region21
    $region20: #{tpu_custom_call.1} parent=1 // pred_region
      _
    $region21: #{tpu_custom_call.1} parent=1 // pred_fallthru
      _
    %v22 = vld [vmem:[%s0] sm:$0xff]
    %v23 = vld [vmem:[%s0 + $0x8] sm:$0xff]
    %v24 = vld [vmem:[%s0 + $0x10] sm:$0xff]
    %v25 = vld [vmem:[%s0 + $0x18] sm:$0xff]
    %v26 = vpack.c.bf16 %v23, %v22
    %v27 = vpack.c.bf16 %v25, %v24
    %v28 = vld [vmem:[%s1] sm:$0xf]
    %v29 = vld [vmem:[%s1 + $0x4] sm:$0xf]
    %v30 = vld [vmem:[%s2] sm:$0x1]
    %v32 = vlaneseq
    %v33 = vshrl.u32 %v32, 7
    %v34 = vsub.s32 0, %v33
    %v35 = vrot.slane %v30, %v34
    %v39 = vunpack.c.l.b16 %v28
    %v40 = vunpack.c.l.b16 %v29
    %v41 = vpack.c.b16 %v40, %v39
    %vm43 = vcmask 130048
    %v45 = vsel %vm43, %v26, 0
    %v48 = vsel %vm43, %v27, 0
    %50 = vmatprep.subr.bf16.mxu0 0
    %51 = vmatpush1.bf16.msra.mxu0 %v41
    %52 = vmatprep.subr.bf16.mxu0 0
    %53 = vmatpush1.bf16.msra.mxu0 0
    %54 = vmatprep.subr.bf16.mxu0 0
    %55 = vmatpush1.bf16.msra.mxu0 0
    %56 = vmatprep.subr.bf16.mxu0 0
    %57 = vmatpush1.bf16.msra.mxu0 0
    %58 = vmatprep.subr.bf16.mxu0 0
    %59 = vmatpush1.bf16.msra.mxu0 0
    %60 = vmatprep.subr.bf16.mxu0 0
    %61 = vmatpush1.bf16.msra.mxu0 0
    %62 = vmatprep.subr.bf16.mxu0 0
    %63 = vmatpush1.bf16.msra.mxu0 0
    %64 = vmatprep.subr.bf16.mxu0 0
    %65 = vmatpush1.bf16.msra.mxu0 0
    %66 = vmatprep.subr.bf16.mxu0 0
    %67 = vmatpush1.bf16.msra.mxu0 0
    %68 = vmatprep.subr.bf16.mxu0 0
    %69 = vmatpush1.bf16.msra.mxu0 0
    %70 = vmatprep.subr.bf16.mxu0 0
    %71 = vmatpush1.bf16.msra.mxu0 0
    %72 = vmatprep.subr.bf16.mxu0 0
    %73 = vmatpush1.bf16.msra.mxu0 0
    %74 = vmatprep.subr.bf16.mxu0 0
    %75 = vmatpush1.bf16.msra.mxu0 0
    %76 = vmatprep.subr.bf16.mxu0 0
    %77 = vmatpush1.bf16.msra.mxu0 0
    %78 = vmatprep.subr.bf16.mxu0 0
    %79 = vmatpush1.bf16.msra.mxu0 0
    %80 = vmatprep.subr.bf16.mxu0 0
    %81 = vmatpush1.bf16.msra.mxu0 0
    %82 = vmatprep.mubr.bf16.mxu0 0
    %83 = vmatmul.mubr.bf16.gmra.mrb[0].mxu0 %v45
    %v84 = vpop.f32.mrb[0].mxu0
    %v85 = vadd.f32 %v35, %v84
    %v86 = vpop.f32.mrb[0].mxu0
    %v87 = vpop.f32.mrb[0].mxu0
    %v88 = vadd.f32 %v35, %v87
    %v89 = vpop.f32.mrb[0].mxu0
    %90 = vmatprep.mubr.bf16.mxu0 0
    %91 = vmatmul.mubr.bf16.gmra.mrb[0].mxu0 %v48
    %v92 = vpop.f32.mrb[0].mxu0
    %v93 = vadd.f32 %v35, %v92
    %v94 = vpop.f32.mrb[0].mxu0
    %v95 = vpop.f32.mrb[0].mxu0
    %v96 = vadd.f32 %v35, %v95
    %v97 = vpop.f32.mrb[0].mxu0
    %98 = vdwg.mxu0
    %v99 = vld [vmem:[%s3] sm:$0x1]
    %v100 = vld [vmem:[%s4] sm:$0x1]
    %101 = vadd.xlane.f32.xlu0 %v85
    %v102 = vpop.xlane.xlu0 %101
    %103 = vadd.xlane.f32.xlu0 %v88
    %v104 = vpop.xlane.xlu0 %103
    %105 = vadd.xlane.f32.xlu0 %v93
    %v106 = vpop.xlane.xlu0 %105
    %107 = vadd.xlane.f32.xlu0 %v96
    %v108 = vpop.xlane.xlu0 %107
    %v109 = vrcp.pop 128.0
    %v110 = vmul.f32 %v102, %v109
    %v111 = vmul.f32 %v104, %v109
    %v112 = vmul.f32 %v106, %v109
    %v113 = vmul.f32 %v108, %v109
    %v114 = vsub.f32 %v85, %v110
    %v115 = vsub.f32 %v88, %v111
    %v116 = vsub.f32 %v93, %v112
    %v117 = vsub.f32 %v96, %v113
    %v118 = vmul.f32 %v114, %v114
    %v119 = vmul.f32 %v115, %v115
    %v120 = vmul.f32 %v116, %v116
    %v121 = vmul.f32 %v117, %v117
    %122 = vadd.xlane.f32.xlu0 %v118
    %v123 = vpop.xlane.xlu0 %122
    %124 = vadd.xlane.f32.xlu0 %v119
    %v125 = vpop.xlane.xlu0 %124
    %126 = vadd.xlane.f32.xlu0 %v120
    %v127 = vpop.xlane.xlu0 %126
    %128 = vadd.xlane.f32.xlu0 %v121
    %v129 = vpop.xlane.xlu0 %128
    %v130 = vmul.f32 %v123, %v109
    %v131 = vmul.f32 %v125, %v109
    %v132 = vmul.f32 %v127, %v109
    %v133 = vmul.f32 %v129, %v109
    %v134 = vadd.f32 %v130, 1e-05
    %v135 = vadd.f32 %v131, 1e-05
    %v136 = vadd.f32 %v132, 1e-05
    %v137 = vadd.f32 %v133, 1e-05
    %v138 = vrsqrt.pop %v134
    %v139 = vrsqrt.pop %v135
    %v140 = vrsqrt.pop %v136
    %v141 = vrsqrt.pop %v137
    %v142 = vmul.f32 %v114, %v138
    %v143 = vmul.f32 %v115, %v139
    %v144 = vmul.f32 %v116, %v140
    %v145 = vmul.f32 %v117, %v141
    %v147 = vlaneseq
    %v148 = vshrl.u32 %v147, 7
    %v149 = vsub.s32 0, %v148
    %v150 = vrot.slane %v99, %v149
    %v152 = vmul.f32 %v142, %v150
    %v153 = vmul.f32 %v143, %v150
    %v154 = vmul.f32 %v144, %v150
    %v155 = vmul.f32 %v145, %v150
    %v157 = vlaneseq
    %v158 = vshrl.u32 %v157, 7
    %v159 = vsub.s32 0, %v158
    %v160 = vrot.slane %v100, %v159
    %v162 = vadd.f32 %v152, %v160
    %v163 = vadd.f32 %v153, %v160
    %v164 = vadd.f32 %v154, %v160
    %v165 = vadd.f32 %v155, %v160
    %v166 = vpack.c.bf16 %v163, %v162
    %v167 = vpack.c.bf16 %v165, %v164
    %v170 = vunpack.c.l.b16 %v166
    %v171 = vunpack.c.h.b16 %v166
    %v172 = vunpack.c.l.b16 %v167
    %v173 = vunpack.c.h.b16 %v167
    %v174 = vpack.c.b16 %v170, %v170
    %v175 = vpack.c.b16 %v171, %v171
    %v176 = vpack.c.b16 %v172, %v172
    %v177 = vpack.c.b16 %v173, %v173
    %182 = vst [vmem:[#allocation2] sm:$0xf] %v174
    %183 = vst [vmem:[#allocation2 + $0x4] sm:$0xf] %v175
    %184 = vst [vmem:[#allocation2 + $0x8] sm:$0xf] %v176
    %185 = vst [vmem:[#allocation2 + $0xc] sm:$0xf] %v177
    // Predicated region
    $region22: #{tpu_custom_call.1} parent=1 // pred_check
      _
    $region23: #{tpu_custom_call.1} parent=1 // pred_check_branch
      %187 = sbr.rel (0) target = $region25
    $region24: #{tpu_custom_call.1} parent=1 // pred_region
      %s189 = ssub.s32 256, 256
      %190 = vsyncadd [#allocation3], %s189
      %s191 = sshll.u32 [#allocation2], 4
      %s192 = int_to_ptr.vmem [resolvable:$true] %s191
      %197 = dma.vmem_to_hbm [thread:$0]  %s192, 256, %s5, [#allocation3], 64, 64, 4
    $region25: #{tpu_custom_call.1} parent=1 // pred_fallthru
      _
    // Predicated region
    $region26: #{tpu_custom_call.1} parent=1 // pred_check
      _
    $region27: #{tpu_custom_call.1} parent=1 // pred_check_branch
      %199 = sbr.rel (0) target = $region29
    $region28: #{tpu_custom_call.1} parent=1 // pred_region
      %200 = dma.done [#allocation3], 256
    $region29: #{tpu_custom_call.1} parent=1 // pred_fallthru
      _
    %201 = vsyncpa [#allocation3], 1

</llo_original>
